<compile_context>
chip_gen: v6e
topology: v6e:2x2x1
jax: 0.10.0
libtpu: 0.0.40
codegen_flags: <defaults>
</compile_context>

<pallas_src>
import jax
import jax.numpy as jnp
from jax.experimental import pallas as pl
from jax.experimental.pallas import tpu as pltpu


def prepare_qkv_weights(w_query, w_key, w_value):
    """One-time weight prep (call once, outside the forward path).

    Fuses the three (d_in, d_out) projections into a single (d_in, 3*d_out)
    matrix and folds the 1/sqrt(d_out) attention temperature into the query
    columns, so the kernel needs no per-call concat and no per-call scale.
    """
    d_out = w_query.shape[1]
    scale = 1.0 / (d_out ** 0.5)
    return jnp.concatenate([w_query * scale, w_key, w_value], axis=1)


def self_attention_kernel(x_ref, wqkv_ref, o_ref):
    # x_ref:    (batch*seq, d_in)   -- batch pre-flattened by the wrapper so
    #                                  the QKV matmul sees a fat M dimension.
    # wqkv_ref: (d_in, 3*d_out)     -- fused weights, query scale pre-folded.
    # o_ref:    (batch, seq, d_out)
    batch, seq, d_out = o_ref.shape

    x = x_ref[...]                                    # (B*S, d_in)
    wqkv = wqkv_ref[...]                              # (d_in, 3*d_out)

    # Fused Q/K/V projection: one MXU matmul over the whole batch.
    qkv = jnp.dot(x, wqkv, preferred_element_type=jnp.float32)   # (B*S, 3*d_out)

    # Static lane slices, then restore the per-batch structure (seq=8 is a
    # full sublane tile, so this reshape is layout-trivial).
    q = qkv[:, :d_out].reshape(batch, seq, d_out)          # already scaled
    k = qkv[:, d_out:2 * d_out].reshape(batch, seq, d_out)
    v = qkv[:, 2 * d_out:].reshape(batch, seq, d_out)

    # Per-batch scores = q @ k^T (batched contraction, no explicit transpose,
    # and no cross-batch mixing).
    scores = jnp.einsum('bqd,bkd->bqk', q, k,
                        preferred_element_type=jnp.float32)      # (B, S, S)

    # Numerically stable softmax over the last axis (matches torch.softmax).
    m = jnp.max(scores, axis=-1, keepdims=True)
    e = jnp.exp(scores - m)
    denom = jnp.sum(e, axis=-1, keepdims=True)
    attn = e * pl.reciprocal(denom, approx=False)     # exact: 1e-5 tol binding

    ctx = jnp.einsum('bqk,bkd->bqd', attn, v,
                     preferred_element_type=jnp.float32)         # (B, S, d_out)
    o_ref[...] = ctx.astype(o_ref.dtype)


def self_attention_v1(x, w_qkv):
    """Forward pass of SelfAttentionV1 with pre-fused weights.

    x:     (seq, d_in) or (batch, seq, d_in) float32
    w_qkv: (d_in, 3*d_out) from prepare_qkv_weights()
    returns: (seq, d_out) or (batch, seq, d_out)
    """
    squeeze = x.ndim == 2
    if squeeze:
        x = x[None]
    batch, seq, d_in = x.shape
    d_out = w_qkv.shape[1] // 3

    # Free metadata reshape in the wrapper; gives the kernel M = batch*seq.
    x_flat = x.reshape(batch * seq, d_in)

    flops = (2 * batch * seq * d_in * 3 * d_out      # fused QKV projection
             + 2 * batch * seq * seq * d_out         # q @ k^T
             + 2 * batch * seq * seq * d_out)        # attn @ v
    bytes_accessed = 4 * (batch * seq * d_in
                          + d_in * 3 * d_out
                          + batch * seq * d_out)

    out = pl.pallas_call(
        self_attention_kernel,
        out_shape=jax.ShapeDtypeStruct((batch, seq, d_out), x.dtype),
        in_specs=[
            pl.BlockSpec(memory_space=pltpu.MemorySpace.VMEM),
            pl.BlockSpec(memory_space=pltpu.MemorySpace.VMEM),
        ],
        out_specs=pl.BlockSpec(memory_space=pltpu.MemorySpace.VMEM),
        cost_estimate=pl.CostEstimate(
            flops=flops,
            transcendentals=batch * seq * seq,       # exp per score element
            bytes_accessed=bytes_accessed,
        ),
    )(x_flat, w_qkv)

    return out[0] if squeeze else out


def reference(x, wq, wk, wv):
    k = x @ wk
    q = x @ wq
    v = x @ wv
    scores = q @ jnp.swapaxes(k, -1, -2)
    w = jax.nn.softmax(scores / (k.shape[-1] ** 0.5), axis=-1)
    return w @ v


if __name__ == "__main__":
    # Small shapes consistent with the module: seq=8, d_in=32, d_out=16.
    seq, d_in, d_out = 8, 32, 16
    batch = 4

    key = jax.random.PRNGKey(0)
    kx, kxb, kq, kk, kv = jax.random.split(key, 5)

    x = jax.random.normal(kx, (seq, d_in), dtype=jnp.float32)
    x_batched = jax.random.normal(kxb, (batch, seq, d_in), dtype=jnp.float32)
    # Deterministic parameter init mirroring torch.rand (uniform [0, 1)).
    w_query = jax.random.uniform(kq, (d_in, d_out), dtype=jnp.float32)
    w_key = jax.random.uniform(kk, (d_in, d_out), dtype=jnp.float32)
    w_value = jax.random.uniform(kv, (d_in, d_out), dtype=jnp.float32)

    # One-time weight preparation (analogue of module __init__), outside the
    # per-call forward path.
    w_qkv = jax.block_until_ready(prepare_qkv_weights(w_query, w_key, w_value))

    # Unbatched call (matches the module's forward signature exactly).
    out = jax.block_until_ready(self_attention_v1(x, w_qkv))
    ref = reference(x, w_query, w_key, w_value)
    assert out.shape == (seq, d_out)
    assert jnp.allclose(out, ref, atol=1e-5, rtol=1e-5)

    # Batched call: all examples processed in a single kernel invocation.
    out_b = jax.block_until_ready(self_attention_v1(x_batched, w_qkv))
    ref_b = reference(x_batched, w_query, w_key, w_value)
    assert out_b.shape == (batch, seq, d_out)
    assert jnp.allclose(out_b, ref_b, atol=1e-5, rtol=1e-5)

    print("KERNEL_OK")
</pallas_src>

<mosaic_0001>
module attributes {stable_mosaic.version = 11 : i64} {
  func.func @self_attention_kernel(%arg0: memref<8x32xf32, #tpu.memory_space<vmem>>, %arg1: memref<32x48xf32, #tpu.memory_space<vmem>>, %arg2: memref<1x8x16xf32, #tpu.memory_space<vmem>>) attributes {dimension_semantics = [], scalar_prefetch = 0 : i64, scratch_operands = 0 : i64, tpu.core_type = #tpu.core_type<tc>} {
    %c0 = arith.constant 0 : index
    %c0_0 = arith.constant 0 : index
    %0 = vector.load %arg0[%c0, %c0_0] : memref<8x32xf32, #tpu.memory_space<vmem>>, vector<8x32xf32>
    %c0_1 = arith.constant 0 : index
    %c0_2 = arith.constant 0 : index
    %1 = vector.load %arg1[%c0_1, %c0_2] : memref<32x48xf32, #tpu.memory_space<vmem>>, vector<32x48xf32>
    %cst = arith.constant dense<0.000000e+00> : vector<8x48xf32>
    %2 = tpu.matmul %0, %1, %cst {dimension_numbers = #tpu.dot_dimension_numbers<[1], [0], [0], [1], [0, 0, 1, 1], [], []>} : vector<8x32xf32>, vector<32x48xf32>, vector<8x48xf32> -> vector<8x48xf32>
    %3 = vector.extract_strided_slice %2 {offsets = [0, 0], sizes = [8, 16], strides = [1, 1]} : vector<8x48xf32> to vector<8x16xf32>
    %4 = vector.shape_cast %3 : vector<8x16xf32> to vector<1x8x16xf32>
    %5 = vector.extract_strided_slice %2 {offsets = [0, 16], sizes = [8, 16], strides = [1, 1]} : vector<8x48xf32> to vector<8x16xf32>
    %6 = vector.shape_cast %5 : vector<8x16xf32> to vector<1x8x16xf32>
    %7 = vector.extract_strided_slice %2 {offsets = [0, 32], sizes = [8, 16], strides = [1, 1]} : vector<8x48xf32> to vector<8x16xf32>
    %8 = vector.shape_cast %7 : vector<8x16xf32> to vector<1x8x16xf32>
    "tpu.trace_start"() <{level = 10 : i32, message = "bqd,bkd->bqk"}> : () -> ()
    %cst_3 = arith.constant dense<0.000000e+00> : vector<1x8x8xf32>
    %9 = tpu.matmul %4, %6, %cst_3 {dimension_numbers = #tpu.dot_dimension_numbers<[2], [2], [1], [1], [0, 0, 0, 1, 1, 1], [0], [0]>} : vector<1x8x16xf32>, vector<1x8x16xf32>, vector<1x8x8xf32> -> vector<1x8x8xf32>
    "tpu.trace_stop"() : () -> ()
    %cst_4 = arith.constant dense<0xFF800000> : vector<1x8xf32>
    %10 = vector.multi_reduction <maximumf>, %9, %cst_4 [2] : vector<1x8x8xf32> to vector<1x8xf32>
    %11 = vector.shape_cast %10 : vector<1x8xf32> to vector<1x8x1xf32>
    %12 = vector.broadcast %11 : vector<1x8x1xf32> to vector<1x8x8xf32>
    %13 = arith.subf %9, %12 : vector<1x8x8xf32>
    %14 = math.exp %13 : vector<1x8x8xf32>
    %cst_5 = arith.constant dense<0.000000e+00> : vector<1x8xf32>
    %15 = vector.multi_reduction <add>, %14, %cst_5 [2] : vector<1x8x8xf32> to vector<1x8xf32>
    %16 = vector.shape_cast %15 : vector<1x8xf32> to vector<1x8x1xf32>
    %17 = tpu.reciprocal %16 : vector<1x8x1xf32> -> vector<1x8x1xf32>
    %18 = vector.broadcast %17 : vector<1x8x1xf32> to vector<1x8x8xf32>
    %19 = arith.mulf %14, %18 : vector<1x8x8xf32>
    "tpu.trace_start"() <{level = 10 : i32, message = "bqk,bkd->bqd"}> : () -> ()
    %cst_6 = arith.constant dense<0.000000e+00> : vector<1x8x16xf32>
    %20 = tpu.matmul %19, %8, %cst_6 {dimension_numbers = #tpu.dot_dimension_numbers<[2], [1], [1], [2], [0, 0, 0, 1, 1, 2], [0], [0]>} : vector<1x8x8xf32>, vector<1x8x16xf32>, vector<1x8x16xf32> -> vector<1x8x16xf32>
    "tpu.trace_stop"() : () -> ()
    %c0_7 = arith.constant 0 : index
    %c0_8 = arith.constant 0 : index
    %c0_9 = arith.constant 0 : index
    %21 = vector.load %arg2[%c0_7, %c0_8, %c0_9] : memref<1x8x16xf32, #tpu.memory_space<vmem>>, vector<1x8x16xf32>
    tpu.vector_store %arg2[%c0_7, %c0_8, %c0_9], %20 {strides = array<i32>} : memref<1x8x16xf32, #tpu.memory_space<vmem>>, vector<1x8x16xf32>,
    return
  }
}

</mosaic_0001>

<llo_original>
// kernel: tpu_custom_call.1
$region0: #{tpu_custom_call.1}
  #allocation0 [shape = 'u32[]', space=smem, size = 0x4, offset = 0x4, fixed_abs, tag = 'smem constant byte address 0x4 - core index']
  #allocation1 [shape = 'u32[144,128]{1,0:T(1,128)}', space=vmem, size = 0x12000, scoped, tag = 'internal scratch']
  %s0 = inlined_call_operand.hbm [shape: f32[8,32], index: 0, kind: input, shape index: {}]
  %s1 = inlined_call_operand.hbm [shape: f32[32,48], index: 1, kind: input, shape index: {}]
  %s2 = inlined_call_operand.hbm [shape: f32[1,8,16], index: 2, kind: output, shape index: {}]
  %s3 = sld [smem:[#allocation0]]
  $region26: #{tpu_custom_call.1} parent=0
    _
  %s5 = ssub.s32 1, %s3
  %s6 = scalar_select 0, %s5, %s3
  $region1: #{tpu_custom_call.1} parent=0
    #allocation2 [shape = 'u8[4096]{0}', space=vmem, size = 0x1000, scoped, tag = 'input window, operand 0, single buffered']
    #allocation3 [shape = 's32[1]{0}', space=sflag, size = 0x4, scoped, tag = 'scoped memory for tpu_custom_call.1']
    #allocation4 [shape = 's32[1]{0}', space=sflag, size = 0x4, scoped, tag = 'scoped memory for tpu_custom_call.1']
    #allocation5 [shape = 'u8[16384]{0}', space=vmem, size = 0x4000, scoped, tag = 'input window, operand 1, single buffered']
    #allocation6 [shape = 's32[1]{0}', space=sflag, size = 0x4, scoped, tag = 'scoped memory for tpu_custom_call.1']
    #allocation7 [shape = 'u8[4096]{0}', space=vmem, size = 0x1000, scoped, tag = 'output window, operand 0, single buffered']
    %7 = vsyncpa [#allocation3], 0
    %8 = vsyncpa [#allocation6], 0
    %9 = vsyncpa [#allocation4], 0
    // Predicated region
    $region2: #{tpu_custom_call.1} parent=1 // pred_check
      _
    $region3: #{tpu_custom_call.1} parent=1 // pred_check_branch
      %11 = sbr.rel (0) target = $region5
    $region4: #{tpu_custom_call.1} parent=1 // pred_region
      %s13 = ssub.s32 128, 128
      %14 = vsyncadd [#allocation3], %s13
      %s16 = sshll.u32 [#allocation2], 4
      %s17 = int_to_ptr.vmem [resolvable:$true] %s16
      %19 = dma.hbm_to_vmem [thread:$0]  %s0, 128, %s17, [#allocation3]
    $region5: #{tpu_custom_call.1} parent=1 // pred_fallthru
      _
    // Predicated region
    $region6: #{tpu_custom_call.1} parent=1 // pred_check
      _
    $region7: #{tpu_custom_call.1} parent=1 // pred_check_branch
      %21 = sbr.rel (0) target = $region9
    $region8: #{tpu_custom_call.1} parent=1 // pred_region
      %s23 = ssub.s32 512, 512
      %24 = vsyncadd [#allocation6], %s23
      %s25 = sshll.u32 [#allocation5], 4
      %s26 = int_to_ptr.vmem [resolvable:$true] %s25
      %31 = dma.hbm_to_vmem [thread:$0]  %s1, 512, %s26, [#allocation6], 128, 128, 8
    $region9: #{tpu_custom_call.1} parent=1 // pred_fallthru
      _
    // Predicated region
    $region10: #{tpu_custom_call.1} parent=1 // pred_check
      _
    $region11: #{tpu_custom_call.1} parent=1 // pred_check_branch
      %33 = sbr.rel (0) target = $region13
    $region12: #{tpu_custom_call.1} parent=1 // pred_region
      %34 = dma.done [#allocation3], 128
    $region13: #{tpu_custom_call.1} parent=1 // pred_fallthru
      _
    // Predicated region
    $region14: #{tpu_custom_call.1} parent=1 // pred_check
      _
    $region15: #{tpu_custom_call.1} parent=1 // pred_check_branch
      %36 = sbr.rel (0) target = $region17
    $region16: #{tpu_custom_call.1} parent=1 // pred_region
      %37 = dma.done [#allocation6], 512
    $region17: #{tpu_custom_call.1} parent=1 // pred_fallthru
      _
    %v38 = vld [vmem:[#allocation2] sm:$0xff]
    %v39 = vld [vmem:[#allocation5] sm:$0xff]
    %v40 = vld [vmem:[#allocation5 + $0x8] sm:$0xff]
    %v41 = vld [vmem:[#allocation5 + $0x10] sm:$0xff]
    %v42 = vld [vmem:[#allocation5 + $0x18] sm:$0xff]
    %vm43 = vcmask 261120
    %v45 = vsel %vm43, %v38, 0
    %47 = vmatprep.subr.mxu0 0.0
    %48 = vmatpush1.msra.mxu0 0.0
    %49 = vmatprep.subr.mxu0 0.0
    %50 = vmatpush1.msra.mxu0 0.0
    %51 = vmatprep.subr.mxu0 0.0
    %52 = vmatpush1.msra.mxu0 0.0
    %53 = vmatprep.subr.mxu0 0.0
    %54 = vmatpush1.msra.mxu0 0.0
    %55 = vmatprep.subr.mxu0 0.0
    %56 = vmatpush1.msra.mxu0 0.0
    %57 = vmatprep.subr.mxu0 0.0
    %58 = vmatpush1.msra.mxu0 0.0
    %59 = vmatprep.subr.mxu0 0.0
    %60 = vmatpush1.msra.mxu0 0.0
    %61 = vmatprep.subr.mxu0 0.0
    %62 = vmatpush1.msra.mxu0 0.0
    %63 = vmatprep.subr.mxu0 0.0
    %64 = vmatpush1.msra.mxu0 0.0
    %65 = vmatprep.subr.mxu0 0.0
    %66 = vmatpush1.msra.mxu0 0.0
    %67 = vmatprep.subr.mxu0 0.0
    %68 = vmatpush1.msra.mxu0 0.0
    %69 = vmatprep.subr.mxu0 0.0
    %70 = vmatpush1.msra.mxu0 0.0
    %71 = vmatprep.subr.mxu0 0.0
    %72 = vmatpush1.msra.mxu0 %v42
    %73 = vmatprep.subr.mxu0 0.0
    %74 = vmatpush1.msra.mxu0 %v41
    %75 = vmatprep.subr.mxu0 0.0
    %76 = vmatpush1.msra.mxu0 %v40
    %77 = vmatprep.subr.mxu0 0.0
    %78 = vmatpush1.msra.mxu0 %v39
    %79 = vmatprep.subr.mxu0 0.0
    %80 = vmatpush2.msra.mxu0 0.0
    %81 = vmatprep.subr.mxu0 0.0
    %82 = vmatpush2.msra.mxu0 0.0
    %83 = vmatprep.subr.mxu0 0.0
    %84 = vmatpush2.msra.mxu0 0.0
    %85 = vmatprep.subr.mxu0 0.0
    %86 = vmatpush2.msra.mxu0 0.0
    %87 = vmatprep.subr.mxu0 0.0
    %88 = vmatpush2.msra.mxu0 0.0
    %89 = vmatprep.subr.mxu0 0.0
    %90 = vmatpush2.msra.mxu0 0.0
    %91 = vmatprep.subr.mxu0 0.0
    %92 = vmatpush2.msra.mxu0 0.0
    %93 = vmatprep.subr.mxu0 0.0
    %94 = vmatpush2.msra.mxu0 0.0
    %95 = vmatprep.subr.mxu0 0.0
    %96 = vmatpush2.msra.mxu0 0.0
    %97 = vmatprep.subr.mxu0 0.0
    %98 = vmatpush2.msra.mxu0 0.0
    %99 = vmatprep.subr.mxu0 0.0
    %100 = vmatpush2.msra.mxu0 0.0
    %101 = vmatprep.subr.mxu0 0.0
    %102 = vmatpush2.msra.mxu0 0.0
    %103 = vmatprep.subr.mxu0 0.0
    %104 = vmatpush2.msra.mxu0 0.0
    %105 = vmatprep.subr.mxu0 0.0
    %106 = vmatpush2.msra.mxu0 0.0
    %107 = vmatprep.subr.mxu0 0.0
    %108 = vmatpush2.msra.mxu0 0.0
    %109 = vmatprep.subr.mxu0 0.0
    %110 = vmatpush2.msra.mxu0 0.0
    %111 = vmatprep.mubr.f32.mxu0 0.0
    %112 = vmatmul.mubr.f32.gmra.mxu0 %v45
    %v113 = vpop.f32.mrf.mxu0
    %v114 = vadd.f32 0.0, %v113
    %v115 = vpop.f32.mrf.mxu0
    %116 = vdwg.mxu0
    %118 = vrot.lane.b32.xlu0 %v114, 112
    %v119 = vpop.permute.xlu0 %118
    %vm120 = vcmask 130048
    %v121 = vsel %vm120, %v114, 0
    %v123 = vsel %vm120, %v119, 0
    %125 = vmatprep.subr.mxu0 0.0
    %126 = vmatpush1.xpose.msra.mxu0 0.0
    %127 = vmatprep.subr.mxu0 0.0
    %128 = vmatpush1.xpose.msra.mxu0 0.0
    %129 = vmatprep.subr.mxu0 0.0
    %130 = vmatpush1.xpose.msra.mxu0 0.0
    %131 = vmatprep.subr.mxu0 0.0
    %132 = vmatpush1.xpose.msra.mxu0 0.0
    %133 = vmatprep.subr.mxu0 0.0
    %134 = vmatpush1.xpose.msra.mxu0 0.0
    %135 = vmatprep.subr.mxu0 0.0
    %136 = vmatpush1.xpose.msra.mxu0 0.0
    %137 = vmatprep.subr.mxu0 0.0
    %138 = vmatpush1.xpose.msra.mxu0 0.0
    %139 = vmatprep.subr.mxu0 0.0
    %140 = vmatpush1.xpose.msra.mxu0 0.0
    %141 = vmatprep.subr.mxu0 0.0
    %142 = vmatpush1.xpose.msra.mxu0 0.0
    %143 = vmatprep.subr.mxu0 0.0
    %144 = vmatpush1.xpose.msra.mxu0 0.0
    %145 = vmatprep.subr.mxu0 0.0
    %146 = vmatpush1.xpose.msra.mxu0 0.0
    %147 = vmatprep.subr.mxu0 0.0
    %148 = vmatpush1.xpose.msra.mxu0 0.0
    %149 = vmatprep.subr.mxu0 0.0
    %150 = vmatpush1.xpose.msra.mxu0 0.0
    %151 = vmatprep.subr.mxu0 0.0
    %152 = vmatpush1.xpose.msra.mxu0 0.0
    %153 = vmatprep.subr.mxu0 0.0
    %154 = vmatpush1.xpose.msra.mxu0 0.0
    %155 = vmatprep.subr.mxu0 0.0
    %156 = vmatpush1.xpose.msra.mxu0 %v123
    %157 = vmatprep.subr.mxu0 0.0
    %158 = vmatpush2.xpose.msra.mxu0 0.0
    %159 = vmatprep.subr.mxu0 0.0
    %160 = vmatpush2.xpose.msra.mxu0 0.0
    %161 = vmatprep.subr.mxu0 0.0
    %162 = vmatpush2.xpose.msra.mxu0 0.0
    %163 = vmatprep.subr.mxu0 0.0
    %164 = vmatpush2.xpose.msra.mxu0 0.0
    %165 = vmatprep.subr.mxu0 0.0
    %166 = vmatpush2.xpose.msra.mxu0 0.0
    %167 = vmatprep.subr.mxu0 0.0
    %168 = vmatpush2.xpose.msra.mxu0 0.0
    %169 = vmatprep.subr.mxu0 0.0
    %170 = vmatpush2.xpose.msra.mxu0 0.0
    %171 = vmatprep.subr.mxu0 0.0
    %172 = vmatpush2.xpose.msra.mxu0 0.0
    %173 = vmatprep.subr.mxu0 0.0
    %174 = vmatpush2.xpose.msra.mxu0 0.0
    %175 = vmatprep.subr.mxu0 0.0
    %176 = vmatpush2.xpose.msra.mxu0 0.0
    %177 = vmatprep.subr.mxu0 0.0
    %178 = vmatpush2.xpose.msra.mxu0 0.0
    %179 = vmatprep.subr.mxu0 0.0
    %180 = vmatpush2.xpose.msra.mxu0 0.0
    %181 = vmatprep.subr.mxu0 0.0
    %182 = vmatpush2.xpose.msra.mxu0 0.0
    %183 = vmatprep.subr.mxu0 0.0
    %184 = vmatpush2.xpose.msra.mxu0 0.0
    %185 = vmatprep.subr.mxu0 0.0
    %186 = vmatpush2.xpose.msra.mxu0 0.0
    %187 = vmatprep.subr.mxu0 0.0
    %188 = vmatpush2.xpose.msra.mxu0 0.0
    %189 = vmatprep.mubr.f32.mxu0 0.0
    %190 = vmatmul.mubr.f32.gmra.mxu0 %v121
    %v191 = vpop.f32.mrf.mxu0
    %v192 = vadd.f32 0.0, %v191
    %v193 = vpop.f32.mrf.mxu0
    %194 = vdwg.mxu0
    %vm195 = vcmask 64512
    %v196 = vsel %vm195, %v192, -inf
    %197 = vmax.xlane.f32.xlu0 %v196
    %v198 = vpop.xlane.xlu0 %197
    %v199 = vsub.f32 %v192, %v198
    %v200 = vmul.f32 %v199, 1.442695
    %v201 = vpow.pop %v200
    %v202 = vsel %vm195, %v201, 0.0
    %203 = vadd.xlane.f32.xlu0 %v202
    %v204 = vpop.xlane.xlu0 %203
    %v205 = vrcp.pop %v204
    %v206 = vmul.f32 %v201, %v205
    %207 = vrot.lane.b32.xlu0 %v114, 96
    %v208 = vpop.permute.xlu0 %207
    %v211 = vsel %vm195, %v206, 0
    %213 = vmatprep.subr.mxu0 0.0
    %214 = vmatpush1.msra.mxu0 0.0
    %215 = vmatprep.subr.mxu0 0.0
    %216 = vmatpush1.msra.mxu0 0.0
    %217 = vmatprep.subr.mxu0 0.0
    %218 = vmatpush1.msra.mxu0 0.0
    %219 = vmatprep.subr.mxu0 0.0
    %220 = vmatpush1.msra.mxu0 0.0
    %221 = vmatprep.subr.mxu0 0.0
    %222 = vmatpush1.msra.mxu0 0.0
    %223 = vmatprep.subr.mxu0 0.0
    %224 = vmatpush1.msra.mxu0 0.0
    %225 = vmatprep.subr.mxu0 0.0
    %226 = vmatpush1.msra.mxu0 0.0
    %227 = vmatprep.subr.mxu0 0.0
    %228 = vmatpush1.msra.mxu0 0.0
    %229 = vmatprep.subr.mxu0 0.0
    %230 = vmatpush1.msra.mxu0 0.0
    %231 = vmatprep.subr.mxu0 0.0
    %232 = vmatpush1.msra.mxu0 0.0
    %233 = vmatprep.subr.mxu0 0.0
    %234 = vmatpush1.msra.mxu0 0.0
    %235 = vmatprep.subr.mxu0 0.0
    %236 = vmatpush1.msra.mxu0 0.0
    %237 = vmatprep.subr.mxu0 0.0
    %238 = vmatpush1.msra.mxu0 0.0
    %239 = vmatprep.subr.mxu0 0.0
    %240 = vmatpush1.msra.mxu0 0.0
    %241 = vmatprep.subr.mxu0 0.0
    %242 = vmatpush1.msra.mxu0 0.0
    %243 = vmatprep.subr.mxu0 0.0
    %244 = vmatpush1.msra.mxu0 %v208
    %245 = vmatprep.subr.mxu0 0.0
    %246 = vmatpush2.msra.mxu0 0.0
    %247 = vmatprep.subr.mxu0 0.0
    %248 = vmatpush2.msra.mxu0 0.0
    %249 = vmatprep.subr.mxu0 0.0
    %250 = vmatpush2.msra.mxu0 0.0
    %251 = vmatprep.subr.mxu0 0.0
    %252 = vmatpush2.msra.mxu0 0.0
    %253 = vmatprep.subr.mxu0 0.0
    %254 = vmatpush2.msra.mxu0 0.0
    %255 = vmatprep.subr.mxu0 0.0
    %256 = vmatpush2.msra.mxu0 0.0
    %257 = vmatprep.subr.mxu0 0.0
    %258 = vmatpush2.msra.mxu0 0.0
    %259 = vmatprep.subr.mxu0 0.0
    %260 = vmatpush2.msra.mxu0 0.0
    %261 = vmatprep.subr.mxu0 0.0
    %262 = vmatpush2.msra.mxu0 0.0
    %263 = vmatprep.subr.mxu0 0.0
    %264 = vmatpush2.msra.mxu0 0.0
    %265 = vmatprep.subr.mxu0 0.0
    %266 = vmatpush2.msra.mxu0 0.0
    %267 = vmatprep.subr.mxu0 0.0
    %268 = vmatpush2.msra.mxu0 0.0
    %269 = vmatprep.subr.mxu0 0.0
    %270 = vmatpush2.msra.mxu0 0.0
    %271 = vmatprep.subr.mxu0 0.0
    %272 = vmatpush2.msra.mxu0 0.0
    %273 = vmatprep.subr.mxu0 0.0
    %274 = vmatpush2.msra.mxu0 0.0
    %275 = vmatprep.subr.mxu0 0.0
    %276 = vmatpush2.msra.mxu0 0.0
    %277 = vmatprep.mubr.f32.mxu0 0.0
    %278 = vmatmul.mubr.f32.gmra.mxu0 %v211
    %v279 = vpop.f32.mrf.mxu0
    %v280 = vadd.f32 0.0, %v279
    %v281 = vpop.f32.mrf.mxu0
    %282 = vdwg.mxu0
    %283 = vst.msk [vmem:[#allocation7] sm:$0xff] %vm120, %v280
    // Predicated region
    $region18: #{tpu_custom_call.1} parent=1 // pred_check
      _
    $region19: #{tpu_custom_call.1} parent=1 // pred_check_branch
      %285 = sbr.rel (0) target = $region21
    $region20: #{tpu_custom_call.1} parent=1 // pred_region
      %s287 = ssub.s32 128, 128
      %288 = vsyncadd [#allocation4], %s287
      %s290 = sshll.u32 [#allocation7], 4
      %s291 = int_to_ptr.vmem [resolvable:$true] %s290
      %293 = dma.vmem_to_hbm [thread:$0]  %s291, 128, %s2, [#allocation4]
    $region21: #{tpu_custom_call.1} parent=1 // pred_fallthru
      _
    // Predicated region
    $region22: #{tpu_custom_call.1} parent=1 // pred_check
      _
    $region23: #{tpu_custom_call.1} parent=1 // pred_check_branch
      %295 = sbr.rel (0) target = $region25
    $region24: #{tpu_custom_call.1} parent=1 // pred_region
      %296 = dma.done [#allocation4], 128
    $region25: #{tpu_custom_call.1} parent=1 // pred_fallthru
      _
    %297 = vsyncpa [#allocation3], 1
    %298 = vsyncpa [#allocation6], 1
    %299 = vsyncpa [#allocation4], 1

</llo_original>
